<compile_context>
chip_gen: v7x
topology: tpu7x:2x2x1
jax: 0.10.0
libtpu: 0.0.40
codegen_flags: <defaults>
</compile_context>

<pallas_src>
import functools
import math

import jax
import jax.numpy as jnp
from jax import lax
from jax.experimental import pallas as pl
from jax.experimental.pallas import tpu as pltpu


_TARGET_TILE_BYTES = 6 * 1024 * 1024   # VMEM footprint target for one step's inputs


# ---------------------------------------------------------------------------
# helpers
# ---------------------------------------------------------------------------
def _round_up(v, m):
    return ((v + m - 1) // m) * m


def _sublane(itemsize):
    # sublane tile height: f32 -> 8, bf16 -> 16, int8/fp8 -> 32
    return max(8, 32 // max(1, itemsize))


def _pick_tile(extent, bytes_per_unit, override, align):
    """Largest tile (multiple of `align`, or the full extent) within budget."""
    if override is not None:
        t = int(override)
    else:
        t = max(align, _TARGET_TILE_BYTES // max(1, bytes_per_unit))
    if t >= extent:
        return extent                      # full extent is always a legal block dim
    t = max(align, (t // align) * align)
    return extent if t >= extent else t


def _vmem_limit_bytes(step_bytes):
    # double-buffered inputs + slack for outputs/alpha/compiler scratch
    need = 2 * step_bytes + (4 << 20)
    return int(min(max(need, 32 << 20), 56 << 20))


def _focal_scale(ce, pt, gamma):
    """(1 - pt) ** gamma * ce, robust for gamma==0 and integral gamma."""
    g = float(gamma)
    if g == 0.0:
        return ce
    if g.is_integer() and g > 0:
        return lax.integer_pow(1.0 - pt, int(g)) * ce
    return jnp.power(jnp.maximum(1.0 - pt, 0.0), g) * ce


# ---------------------------------------------------------------------------
# kernels
# ---------------------------------------------------------------------------
def _focal_rows_kernel(x_ref, y_ref, a_ref, sum_ref, cnt_ref, *,
                       gamma, ignore_index, has_alpha, m_total, tm):
    """Class-last layout.  x:(tm,C)  y:(tm,1)  a:(1,C)  outs:(1,1,1)."""
    x = x_ref[...].astype(jnp.float32)
    y = y_ref[...]

    m = jnp.max(x, axis=-1, keepdims=True)
    z = x - m
    sum_exp = jnp.sum(jnp.exp(z), axis=-1, keepdims=True)
    lse = jnp.log(sum_exp)

    cls = lax.broadcasted_iota(jnp.int32, x.shape, dimension=1)
    onehot = cls == y
    z_y = jnp.sum(jnp.where(onehot, z, 0.0), axis=-1, keepdims=True)
    log_pt = z_y - lse                                    # log_softmax gathered at y

    if has_alpha:
        a_y = jnp.sum(jnp.where(onehot, a_ref[...], 0.0), axis=-1, keepdims=True)
        ce = -(a_y * log_pt)
    else:
        ce = -log_pt

    pt = jnp.exp(log_pt)
    loss = _focal_scale(ce, pt, gamma)

    row = pl.program_id(0) * tm + lax.broadcasted_iota(jnp.int32, y.shape, dimension=0)
    valid = (y != ignore_index) & (row < m_total)         # label mask & ragged-tile mask
    loss = jnp.where(valid, loss, 0.0)

    sum_ref[...] = jnp.reshape(jnp.sum(loss), sum_ref.shape)
    cnt_ref[...] = jnp.reshape(jnp.sum(valid.astype(jnp.float32)), cnt_ref.shape)


def _focal_spatial_kernel(x_ref, y_ref, a_ref, sum_ref, cnt_ref, *,
                          gamma, ignore_index, has_alpha,
                          n_total, bn, l_total, tl):
    """Native NCHW-style layout.  x:(bn,C,tl)  y:(bn,1,tl)  a:(1,C,1)  outs:(1,1,1,1)."""
    x = x_ref[...].astype(jnp.float32)
    y = y_ref[...]

    m = jnp.max(x, axis=1, keepdims=True)                 # class axis = sublanes
    z = x - m
    sum_exp = jnp.sum(jnp.exp(z), axis=1, keepdims=True)
    lse = jnp.log(sum_exp)

    cls = lax.broadcasted_iota(jnp.int32, x.shape, dimension=1)
    onehot = cls == y
    z_y = jnp.sum(jnp.where(onehot, z, 0.0), axis=1, keepdims=True)
    log_pt = z_y - lse

    if has_alpha:
        a_y = jnp.sum(jnp.where(onehot, a_ref[...], 0.0), axis=1, keepdims=True)
        ce = -(a_y * log_pt)
    else:
        ce = -log_pt

    pt = jnp.exp(log_pt)
    loss = _focal_scale(ce, pt, gamma)

    pos = pl.program_id(1) * tl + lax.broadcasted_iota(jnp.int32, y.shape, dimension=2)
    bat = pl.program_id(0) * bn + lax.broadcasted_iota(jnp.int32, y.shape, dimension=0)
    valid = (y != ignore_index) & (pos < l_total) & (bat < n_total)
    loss = jnp.where(valid, loss, 0.0)

    sum_ref[...] = jnp.reshape(jnp.sum(loss), sum_ref.shape)
    cnt_ref[...] = jnp.reshape(jnp.sum(valid.astype(jnp.float32)), cnt_ref.shape)


# ---------------------------------------------------------------------------
# pallas_call wrappers (return (loss_sum, valid_count))
# ---------------------------------------------------------------------------
def _focal_loss_rows(x2, y2, alpha, gamma, ignore_index, row_tile):
    M, C = x2.shape
    itemsize = jnp.dtype(x2.dtype).itemsize
    sub = _sublane(itemsize)

    pad_c = _round_up(C, 128)                              # lane padding in VMEM
    per_row = pad_c * itemsize + 128 * 4                   # logits row + label row
    tm = _pick_tile(M, per_row, row_tile, align=32)
    gm = pl.cdiv(M, tm)
    step_bytes = (_round_up(tm, sub) * pad_c * itemsize
                  + _round_up(tm, 8) * 128 * 4)

    has_alpha = alpha is not None
    a_arr = (jnp.asarray(alpha, jnp.float32).reshape(1, C) if has_alpha
             else jnp.ones((1, C), jnp.float32))
    y2 = y2.reshape(M, 1).astype(jnp.int32)

    kernel = functools.partial(_focal_rows_kernel, gamma=float(gamma),
                               ignore_index=int(ignore_index),
                               has_alpha=has_alpha, m_total=M, tm=tm)

    sums, cnts = pl.pallas_call(
        kernel,
        out_shape=(jax.ShapeDtypeStruct((gm, 1, 1), jnp.float32),
                   jax.ShapeDtypeStruct((gm, 1, 1), jnp.float32)),
        grid_spec=pltpu.PrefetchScalarGridSpec(
            num_scalar_prefetch=0,
            grid=(gm,),
            in_specs=[
                pl.BlockSpec((tm, C), lambda i: (i, 0)),   # logits tile
                pl.BlockSpec((tm, 1), lambda i: (i, 0)),   # labels tile
                pl.BlockSpec((1, C), lambda i: (0, 0)),    # alpha (resident)
            ],
            out_specs=[
                pl.BlockSpec((1, 1, 1), lambda i: (i, 0, 0)),
                pl.BlockSpec((1, 1, 1), lambda i: (i, 0, 0)),
            ],
        ),
        compiler_params=pltpu.CompilerParams(
            dimension_semantics=("parallel",),
            vmem_limit_bytes=_vmem_limit_bytes(step_bytes)),
    )(x2, y2, a_arr)
    return jnp.sum(sums), jnp.sum(cnts)


def _focal_loss_spatial(x3, y3, alpha, gamma, ignore_index, spatial_tile, batch_tile):
    N, C, L = x3.shape
    itemsize = jnp.dtype(x3.dtype).itemsize
    sub = _sublane(itemsize)

    pad_c = _round_up(C, sub)                              # sublane padding in VMEM
    per_pos = pad_c * itemsize + 8 * 4                     # logits col + label (padded)
    tl = _pick_tile(L, per_pos, spatial_tile, align=128)
    pad_tl = _round_up(tl, 128)
    per_batch = pad_c * pad_tl * itemsize + 8 * pad_tl * 4

    # Tile the batch axis too (only when one image's spatial extent fits whole),
    # so small-L inputs still get ~6 MiB steps instead of one tiny step per image.
    if tl >= L:
        if batch_tile is not None:
            bn = max(1, min(int(batch_tile), N))
        else:
            bn = max(1, min(N, _TARGET_TILE_BYTES // max(1, per_batch)))
    else:
        bn = 1

    gn = pl.cdiv(N, bn)
    gl = pl.cdiv(L, tl)
    step_bytes = bn * per_batch

    has_alpha = alpha is not None
    a_arr = (jnp.asarray(alpha, jnp.float32).reshape(1, C, 1) if has_alpha
             else jnp.ones((1, C, 1), jnp.float32))

    kernel = functools.partial(_focal_spatial_kernel, gamma=float(gamma),
                               ignore_index=int(ignore_index),
                               has_alpha=has_alpha,
                               n_total=N, bn=bn, l_total=L, tl=tl)

    sums, cnts = pl.pallas_call(
        kernel,
        out_shape=(jax.ShapeDtypeStruct((gn, gl, 1, 1), jnp.float32),
                   jax.ShapeDtypeStruct((gn, gl, 1, 1), jnp.float32)),
        grid_spec=pltpu.PrefetchScalarGridSpec(
            num_scalar_prefetch=0,
            grid=(gn, gl),
            in_specs=[
                pl.BlockSpec((bn, C, tl), lambda n, l: (n, 0, l)),  # logits tile
                pl.BlockSpec((bn, 1, tl), lambda n, l: (n, 0, l)),  # labels tile
                pl.BlockSpec((1, C, 1), lambda n, l: (0, 0, 0)),    # alpha (resident)
            ],
            out_specs=[
                pl.BlockSpec((1, 1, 1, 1), lambda n, l: (n, l, 0, 0)),
                pl.BlockSpec((1, 1, 1, 1), lambda n, l: (n, l, 0, 0)),
            ],
        ),
        compiler_params=pltpu.CompilerParams(
            dimension_semantics=("parallel", "parallel"),
            vmem_limit_bytes=_vmem_limit_bytes(step_bytes)),
    )(x3, y3, a_arr)
    return jnp.sum(sums), jnp.sum(cnts)


# ---------------------------------------------------------------------------
# public entry point (mirrors FocalLoss.forward)
# ---------------------------------------------------------------------------
def focal_loss(x, y, *, alpha=None, gamma: float = 0.0,
               reduction: str = "mean", ignore_index: int = -100,
               row_tile=None, spatial_tile=None, batch_tile=None):
    """Pallas FocalLoss forward.

    x: (N, C) or (N, C, d1, ..., dK) raw logits.
    y: (N,)   or (N, d1, ..., dK)    integer class labels.
    """
    if reduction not in ("mean", "sum", "none"):
        raise ValueError('Reduction must be one of: "mean", "sum", "none".')
    if reduction == "none":
        # TODO(synk): 'none' returns a compacted (data-dependent length) vector of
        # per-sample losses; no clean static-shape Pallas equivalent.
        raise NotImplementedError("reduction='none' not supported in Pallas port")

    orig_dtype = x.dtype
    if x.ndim > 2:
        n, c = x.shape[0], x.shape[1]
        l = math.prod(x.shape[2:])
        x3 = x.reshape(n, c, l)                           # free reshape, no transpose
        y3 = y.reshape(n, 1, l).astype(jnp.int32)
        total, count = _focal_loss_spatial(x3, y3, alpha, gamma, ignore_index,
                                           spatial_tile, batch_tile)
    else:
        total, count = _focal_loss_rows(x, y, alpha, gamma, ignore_index, row_tile)

    if reduction == "mean":
        out = jnp.where(count > 0, total / jnp.maximum(count, 1.0), 0.0)
    else:  # "sum"
        out = total
    return out.astype(orig_dtype)


# ---------------------------------------------------------------------------
# pure-JAX reference (mirrors the PyTorch module)
# ---------------------------------------------------------------------------
def _focal_loss_reference(x, y, *, alpha=None, gamma=0.0,
                          reduction="mean", ignore_index=-100):
    if x.ndim > 2:
        c = x.shape[1]
        perm = (0,) + tuple(range(2, x.ndim)) + (1,)
        x = jnp.transpose(x, perm).reshape(-1, c)
        y = y.reshape(-1)
    valid = y != ignore_index
    y_safe = jnp.where(valid, y, 0)
    log_p = jax.nn.log_softmax(x.astype(jnp.float32), axis=-1)
    log_pt = jnp.take_along_axis(log_p, y_safe[:, None], axis=-1)[:, 0]
    w = (jnp.ones((x.shape[1],), jnp.float32) if alpha is None
         else jnp.asarray(alpha, jnp.float32))
    ce = -w[y_safe] * log_pt
    pt = jnp.exp(log_pt)
    loss = ((1.0 - pt) ** gamma) * ce
    loss = jnp.where(valid, loss, 0.0)
    cnt = jnp.sum(valid)
    if reduction == "mean":
        return jnp.where(cnt > 0, jnp.sum(loss) / jnp.maximum(cnt, 1), 0.0)
    return jnp.sum(loss)


if __name__ == "__main__":
    key = jax.random.PRNGKey(0)
    ks = jax.random.split(key, 8)

    # Case 1: NCHW segmentation-style input, per-class alpha, gamma=2, mean.
    # (batch tiling packs both images into a single grid step)
    N, C, H, W = 2, 4, 16, 16
    x1 = jax.random.normal(ks[0], (N, C, H, W), jnp.float32)
    y1 = jax.random.randint(ks[1], (N, H, W), 0, C, jnp.int32)
    y1 = jnp.where(jax.random.uniform(ks[2], (N, H, W)) < 0.1, -100, y1)
    alpha = jnp.array([0.25, 0.75, 1.0, 0.5], jnp.float32)

    out1 = jax.block_until_ready(
        focal_loss(x1, y1, alpha=alpha, gamma=2.0, reduction="mean"))
    ref1 = _focal_loss_reference(x1, y1, alpha=alpha, gamma=2.0, reduction="mean")
    assert jnp.allclose(out1, ref1, atol=1e-5, rtol=1e-5), (out1, ref1)

    # Case 2: NCHW with a ragged spatial tile (exercises in-kernel masking),
    # non-integer gamma, no alpha, 'sum' reduction.
    x2 = jax.random.normal(ks[3], (2, 4, 10, 13), jnp.float32)
    y2 = jax.random.randint(ks[4], (2, 10, 13), 0, 4, jnp.int32)
    out2 = jax.block_until_ready(
        focal_loss(x2, y2, gamma=1.5, reduction="sum", spatial_tile=128))
    ref2 = _focal_loss_reference(x2, y2, gamma=1.5, reduction="sum")
    assert jnp.allclose(out2, ref2, atol=1e-4, rtol=1e-5), (out2, ref2)

    # Case 3: plain 2-D classification input with a ragged row tile, gamma=0.
    M, C2 = 100, 10
    x3 = jax.random.normal(ks[5], (M, C2), jnp.float32)
    y3 = jax.random.randint(ks[6], (M,), 0, C2, jnp.int32)
    y3 = jnp.where(jax.random.uniform(ks[7], (M,)) < 0.2, -100, y3)
    out3 = jax.block_until_ready(
        focal_loss(x3, y3, gamma=0.0, reduction="mean", row_tile=32))
    ref3 = _focal_loss_reference(x3, y3, gamma=0.0, reduction="mean")
    assert jnp.allclose(out3, ref3, atol=1e-5, rtol=1e-5), (out3, ref3)

    print("KERNEL_OK")
</pallas_src>

<mosaic_0001>
module attributes {stable_mosaic.version = 11 : i64} {
  func.func @_focal_spatial_kernel(%arg0: i32, %arg1: i32, %arg2: memref<2x4x256xf32, #tpu.memory_space<vmem>>, %arg3: memref<2x1x256xi32, #tpu.memory_space<vmem>>, %arg4: memref<1x4x1xf32, #tpu.memory_space<vmem>>, %arg5: memref<1x1x1x1xf32, #tpu.memory_space<vmem>>, %arg6: memref<1x1x1x1xf32, #tpu.memory_space<vmem>>) attributes {dimension_semantics = [#tpu.dimension_semantics<parallel>, #tpu.dimension_semantics<parallel>], iteration_bounds = array<i64: 1, 1>, scalar_prefetch = 0 : i64, scratch_operands = 0 : i64, tpu.core_type = #tpu.core_type<tc>, window_params = [{transform_indices = @transform_0, window_bounds = array<i64: 2, 4, 256>}, {transform_indices = @transform_1, window_bounds = array<i64: 2, 1, 256>}, {pipeline_mode = #tpu.pipeline_mode<synchronous>, transform_indices = @transform_2, window_bounds = array<i64: 1, 4, 1>}, {transform_indices = @transform_3, window_bounds = array<i64: 1, 1, 1, 1>}, {transform_indices = @transform_4, window_bounds = array<i64: 1, 1, 1, 1>}]} {
    %c0 = arith.constant 0 : index
    %c0_0 = arith.constant 0 : index
    %c0_1 = arith.constant 0 : index
    %0 = vector.load %arg2[%c0, %c0_0, %c0_1] : memref<2x4x256xf32, #tpu.memory_space<vmem>>, vector<2x4x256xf32>
    %c0_2 = arith.constant 0 : index
    %c0_3 = arith.constant 0 : index
    %c0_4 = arith.constant 0 : index
    %1 = vector.load %arg3[%c0_2, %c0_3, %c0_4] : memref<2x1x256xi32, #tpu.memory_space<vmem>>, vector<2x1x256xi32>
    %cst = arith.constant dense<0xFF800000> : vector<2x256xf32>
    %2 = vector.multi_reduction <maximumf>, %0, %cst [1] : vector<2x4x256xf32> to vector<2x256xf32>
    %3 = vector.shape_cast %2 : vector<2x256xf32> to vector<2x1x256xf32>
    %4 = vector.broadcast %3 : vector<2x1x256xf32> to vector<2x4x256xf32>
    %5 = arith.subf %0, %4 : vector<2x4x256xf32>
    %6 = math.exp %5 : vector<2x4x256xf32>
    %cst_5 = arith.constant dense<0.000000e+00> : vector<2x256xf32>
    %7 = vector.multi_reduction <add>, %6, %cst_5 [1] : vector<2x4x256xf32> to vector<2x256xf32>
    %8 = vector.shape_cast %7 : vector<2x256xf32> to vector<2x1x256xf32>
    %9 = math.log %8 : vector<2x1x256xf32>
    %10 = tpu.iota {dimensions = array<i32: 1>} : vector<2x4x256xi32>
    %11 = vector.broadcast %1 : vector<2x1x256xi32> to vector<2x4x256xi32>
    %12 = arith.cmpi eq, %10, %11 : vector<2x4x256xi32>
    %cst_6 = arith.constant 0.000000e+00 : f32
    %13 = vector.broadcast %cst_6 : f32 to vector<2x4x256xf32>
    %14 = arith.select %12, %5, %13 : vector<2x4x256xi1>, vector<2x4x256xf32>
    %cst_7 = arith.constant dense<0.000000e+00> : vector<2x256xf32>
    %15 = vector.multi_reduction <add>, %14, %cst_7 [1] : vector<2x4x256xf32> to vector<2x256xf32>
    %16 = vector.shape_cast %15 : vector<2x256xf32> to vector<2x1x256xf32>
    %17 = arith.subf %16, %9 : vector<2x1x256xf32>
    %c0_8 = arith.constant 0 : index
    %c0_9 = arith.constant 0 : index
    %c0_10 = arith.constant 0 : index
    %18 = vector.load %arg4[%c0_8, %c0_9, %c0_10] : memref<1x4x1xf32, #tpu.memory_space<vmem>>, vector<1x4x1xf32>
    %cst_11 = arith.constant 0.000000e+00 : f32
    %19 = vector.shape_cast %18 : vector<1x4x1xf32> to vector<1x4x1xf32>
    %20 = vector.broadcast %19 : vector<1x4x1xf32> to vector<2x4x256xf32>
    %21 = vector.broadcast %cst_11 : f32 to vector<2x4x256xf32>
    %22 = arith.select %12, %20, %21 : vector<2x4x256xi1>, vector<2x4x256xf32>
    %cst_12 = arith.constant dense<0.000000e+00> : vector<2x256xf32>
    %23 = vector.multi_reduction <add>, %22, %cst_12 [1] : vector<2x4x256xf32> to vector<2x256xf32>
    %24 = vector.shape_cast %23 : vector<2x256xf32> to vector<2x1x256xf32>
    %25 = arith.mulf %24, %17 : vector<2x1x256xf32>
    %cst_13 = arith.constant 0.000000e+00 : f32
    %26 = vector.broadcast %cst_13 : f32 to vector<2x1x256xf32>
    %27 = arith.subf %26, %25 : vector<2x1x256xf32>
    %28 = math.exp %17 : vector<2x1x256xf32>
    %cst_14 = arith.constant 1.000000e+00 : f32
    %29 = vector.broadcast %cst_14 : f32 to vector<2x1x256xf32>
    %30 = arith.subf %29, %28 : vector<2x1x256xf32>
    %31 = arith.mulf %30, %30 : vector<2x1x256xf32>
    %32 = arith.mulf %31, %27 : vector<2x1x256xf32>
    %c256_i32 = arith.constant 256 : i32
    %33 = arith.muli %arg1, %c256_i32 : i32
    %34 = tpu.iota {dimensions = array<i32: 2>} : vector<2x1x256xi32>
    %35 = vector.broadcast %33 : i32 to vector<2x1x256xi32>
    %36 = arith.addi %35, %34 : vector<2x1x256xi32>
    %c2_i32 = arith.constant 2 : i32
    %37 = arith.muli %arg0, %c2_i32 : i32
    %38 = tpu.iota {dimensions = array<i32: 0>} : vector<2x1x256xi32>
    %39 = vector.broadcast %37 : i32 to vector<2x1x256xi32>
    %40 = arith.addi %39, %38 : vector<2x1x256xi32>
    %c-100_i32 = arith.constant -100 : i32
    %41 = vector.broadcast %c-100_i32 : i32 to vector<2x1x256xi32>
    %42 = arith.cmpi ne, %1, %41 : vector<2x1x256xi32>
    %c256_i32_15 = arith.constant 256 : i32
    %43 = vector.broadcast %c256_i32_15 : i32 to vector<2x1x256xi32>
    %44 = arith.cmpi slt, %36, %43 : vector<2x1x256xi32>
    %45 = arith.andi %42, %44 : vector<2x1x256xi1>
    %c2_i32_16 = arith.constant 2 : i32
    %46 = vector.broadcast %c2_i32_16 : i32 to vector<2x1x256xi32>
    %47 = arith.cmpi slt, %40, %46 : vector<2x1x256xi32>
    %48 = arith.andi %45, %47 : vector<2x1x256xi1>
    %cst_17 = arith.constant 0.000000e+00 : f32
    %49 = vector.broadcast %cst_17 : f32 to vector<2x1x256xf32>
    %50 = arith.select %48, %32, %49 : vector<2x1x256xi1>, vector<2x1x256xf32>
    %51 = vector.shape_cast %50 : vector<2x1x256xf32> to vector<1x2x1x256xf32>
    %cst_18 = arith.constant dense<0.000000e+00> : vector<1xf32>
    %52 = vector.multi_reduction <add>, %51, %cst_18 [1, 2, 3] : vector<1x2x1x256xf32> to vector<1xf32>
    %53 = vector.shape_cast %52 : vector<1xf32> to vector<1x1x1x1xf32>
    %54 = vector.extract %53[0, 0, 0, 0] : f32 from vector<1x1x1x1xf32>
    %55 = vector.broadcast %54 : f32 to vector<1x1x1x1xf32>
    %c0_19 = arith.constant 0 : index
    %c0_20 = arith.constant 0 : index
    %c0_21 = arith.constant 0 : index
    %c0_22 = arith.constant 0 : index
    %56 = vector.load %arg5[%c0_19, %c0_20, %c0_21, %c0_22] : memref<1x1x1x1xf32, #tpu.memory_space<vmem>>, vector<1x1x1x1xf32>
    tpu.vector_store %arg5[%c0_19, %c0_20, %c0_21, %c0_22], %55 {strides = array<i32>} : memref<1x1x1x1xf32, #tpu.memory_space<vmem>>, vector<1x1x1x1xf32>,
    %57 = arith.extui %48 : vector<2x1x256xi1> to vector<2x1x256xi32>
    %58 = arith.sitofp %57 : vector<2x1x256xi32> to vector<2x1x256xf32>
    %59 = vector.shape_cast %58 : vector<2x1x256xf32> to vector<1x2x1x256xf32>
    %cst_23 = arith.constant dense<0.000000e+00> : vector<1xf32>
    %60 = vector.multi_reduction <add>, %59, %cst_23 [1, 2, 3] : vector<1x2x1x256xf32> to vector<1xf32>
    %61 = vector.shape_cast %60 : vector<1xf32> to vector<1x1x1x1xf32>
    %62 = vector.extract %61[0, 0, 0, 0] : f32 from vector<1x1x1x1xf32>
    %63 = vector.broadcast %62 : f32 to vector<1x1x1x1xf32>
    %c0_24 = arith.constant 0 : index
    %c0_25 = arith.constant 0 : index
    %c0_26 = arith.constant 0 : index
    %c0_27 = arith.constant 0 : index
    %64 = vector.load %arg6[%c0_24, %c0_25, %c0_26, %c0_27] : memref<1x1x1x1xf32, #tpu.memory_space<vmem>>, vector<1x1x1x1xf32>
    tpu.vector_store %arg6[%c0_24, %c0_25, %c0_26, %c0_27], %63 {strides = array<i32>} : memref<1x1x1x1xf32, #tpu.memory_space<vmem>>, vector<1x1x1x1xf32>,
    return
  }
  func.func @transform_0(%arg0: i32, %arg1: i32) -> (i32, i32, i32) {
    %c0_i32 = arith.constant 0 : i32
    %c0_i32_0 = arith.constant 0 : i32
    return %arg0, %c0_i32, %arg1 : i32, i32, i32
  }
  func.func @transform_1(%arg0: i32, %arg1: i32) -> (i32, i32, i32) {
    %c0_i32 = arith.constant 0 : i32
    %c0_i32_0 = arith.constant 0 : i32
    return %arg0, %c0_i32, %arg1 : i32, i32, i32
  }
  func.func @transform_2(%arg0: i32, %arg1: i32) -> (i32, i32, i32) {
    %c0_i32 = arith.constant 0 : i32
    %c0_i32_0 = arith.constant 0 : i32
    %c0_i32_1 = arith.constant 0 : i32
    %c0_i32_2 = arith.constant 0 : i32
    return %c0_i32, %c0_i32_0, %c0_i32_1 : i32, i32, i32
  }
  func.func @transform_3(%arg0: i32, %arg1: i32) -> (i32, i32, i32, i32) {
    %c0_i32 = arith.constant 0 : i32
    %c0_i32_0 = arith.constant 0 : i32
    %c0_i32_1 = arith.constant 0 : i32
    return %arg0, %arg1, %c0_i32, %c0_i32_0 : i32, i32, i32, i32
  }
  func.func @transform_4(%arg0: i32, %arg1: i32) -> (i32, i32, i32, i32) {
    %c0_i32 = arith.constant 0 : i32
    %c0_i32_0 = arith.constant 0 : i32
    %c0_i32_1 = arith.constant 0 : i32
    return %arg0, %arg1, %c0_i32, %c0_i32_0 : i32, i32, i32, i32
  }
}

</mosaic_0001>

<llo_original>
// kernel: tpu_custom_call.1
$region0: #{tpu_custom_call.1}
  #allocation0 [shape = 'u32[]', space=smem, size = 0x4, offset = 0x4, fixed_abs, tag = 'smem constant byte address 0x4 - core index']
  #allocation1 [shape = 'u32[144,128]{1,0:T(1,128)}', space=vmem, size = 0x12000, scoped, tag = 'internal scratch']
  %s0 = inlined_call_operand.hbm [shape: f32[2,4,256], index: 0, kind: input, shape index: {}]
  %s1 = inlined_call_operand.vmem [shape: s32[2,1,256], index: 1, kind: input, shape index: {}]
  %s2 = inlined_call_operand.vmem [shape: f32[1,4,1], index: 2, kind: input, shape index: {}]
  %s3 = inlined_call_operand.hbm [shape: f32[1,1,1,1], index: 3, kind: output, shape index: {0}]
  %s4 = inlined_call_operand.hbm [shape: f32[1,1,1,1], index: 4, kind: output, shape index: {1}]
  %5 = xla_tuple %s3, %s4
  %s6 = sld [smem:[#allocation0]]
  $region34: #{tpu_custom_call.1} parent=0
    _
  %s8 = ssub.s32 1, %s6
  %s9 = scalar_select 0, %s8, %s6
  $region1: #{tpu_custom_call.1} parent=0
    #allocation2 [shape = 'u8[8192]{0}', space=vmem, size = 0x2000, scoped, tag = 'input window, operand 0, single buffered']
    #allocation3 [shape = 's32[1]{0}', space=sflag, size = 0x4, scoped, tag = 'scoped memory for tpu_custom_call.1']
    #allocation4 [shape = 's32[1]{0}', space=sflag, size = 0x4, scoped, tag = 'scoped memory for tpu_custom_call.1']
    #allocation5 [shape = 'u8[512]{0}', space=vmem, size = 0x400, scoped, tag = 'output window, operand 0, single buffered']
    #allocation6 [shape = 'u8[512]{0}', space=vmem, size = 0x400, scoped, tag = 'output window, operand 1, single buffered']
    #allocation7 [shape = 's32[1]{0}', space=sflag, size = 0x4, scoped, tag = 'scoped memory for tpu_custom_call.1']
    %10 = vsyncpa [#allocation3], 0
    %11 = vsyncpa [#allocation4], 0
    %12 = vsyncpa [#allocation7], 0
    // Predicated region
    $region2: #{tpu_custom_call.1} parent=1 // pred_check
      _
    $region3: #{tpu_custom_call.1} parent=1 // pred_check_branch
      %14 = sbr.rel (0) target = $region5
    $region4: #{tpu_custom_call.1} parent=1 // pred_region
      %s16 = ssub.s32 256, 256
      %17 = vsyncadd [#allocation3], %s16
      %s18 = sshll.u32 [#allocation2], 4
      %s19 = int_to_ptr.vmem [resolvable:$true] %s18
      %24 = dma.hbm_to_vmem [thread:$0]  %s0, 256, %s19, [#allocation3], 128, 128, 8
    $region5: #{tpu_custom_call.1} parent=1 // pred_fallthru
      _
    // Predicated region
    $region6: #{tpu_custom_call.1} parent=1 // pred_check
      _
    $region7: #{tpu_custom_call.1} parent=1 // pred_check_branch
      %26 = sbr.rel (0) target = $region9
    $region8: #{tpu_custom_call.1} parent=1 // pred_region
      _
    $region9: #{tpu_custom_call.1} parent=1 // pred_fallthru
      _
    // Predicated region
    $region10: #{tpu_custom_call.1} parent=1 // pred_check
      _
    $region11: #{tpu_custom_call.1} parent=1 // pred_check_branch
      %28 = sbr.rel (0) target = $region13
    $region12: #{tpu_custom_call.1} parent=1 // pred_region
      _
    $region13: #{tpu_custom_call.1} parent=1 // pred_fallthru
      _
    // Predicated region
    $region14: #{tpu_custom_call.1} parent=1 // pred_check
      _
    $region15: #{tpu_custom_call.1} parent=1 // pred_check_branch
      %30 = sbr.rel (0) target = $region17
    $region16: #{tpu_custom_call.1} parent=1 // pred_region
      %31 = dma.done [#allocation3], 256
    $region17: #{tpu_custom_call.1} parent=1 // pred_fallthru
      _
    %v32 = vld [vmem:[#allocation2] sm:$0xff]
    %v33 = vld [vmem:[#allocation2 + $0x8] sm:$0xff]
    %v34 = vld [vmem:[%s1] sm:$0x3]
    %v35 = vld [vmem:[%s1 + $0x2] sm:$0x3]
    %v38 = vcombine.high %v32, %v32
    %v39 = vcombine.high %v33, %v33
    %vm42 = vcmask 1043456
    %v43 = vsel %vm42, %v32, -inf
    %v44 = vrot.slane %v43, 4
    %v45 = vmax.f32 %v43, %v44
    %v46 = vrot.slane %v45, 2
    %v47 = vmax.f32 %v45, %v46
    %v48 = vrot.slane %v47, 1
    %v49 = vmax.f32 %v47, %v48
    %v50 = vsel %vm42, %v38, -inf
    %v51 = vrot.slane %v50, 4
    %v52 = vmax.f32 %v50, %v51
    %v53 = vrot.slane %v52, 2
    %v54 = vmax.f32 %v52, %v53
    %v55 = vrot.slane %v54, 1
    %v56 = vmax.f32 %v54, %v55
    %v57 = vsel %vm42, %v33, -inf
    %v58 = vrot.slane %v57, 4
    %v59 = vmax.f32 %v57, %v58
    %v60 = vrot.slane %v59, 2
    %v61 = vmax.f32 %v59, %v60
    %v62 = vrot.slane %v61, 1
    %v63 = vmax.f32 %v61, %v62
    %v64 = vsel %vm42, %v39, -inf
    %v65 = vrot.slane %v64, 4
    %v66 = vmax.f32 %v64, %v65
    %v67 = vrot.slane %v66, 2
    %v68 = vmax.f32 %v66, %v67
    %v69 = vrot.slane %v68, 1
    %v70 = vmax.f32 %v68, %v69
    %v75 = vcombine.low %v49, %v56
    %v76 = vcombine.low %v63, %v70
    %v79 = vsub.f32 %v32, %v75
    %v80 = vsub.f32 %v33, %v76
    %v81 = vmul.f32 %v79, 1.442695
    %v82 = vpow.pop %v81
    %v83 = vmul.f32 %v80, 1.442695
    %v84 = vpow.pop %v83
    %v87 = vcombine.high %v82, %v82
    %v88 = vcombine.high %v84, %v84
    %v91 = vsel %vm42, %v82, 0.0
    %v92 = vrot.slane %v91, 4
    %v93 = vadd.f32 %v91, %v92
    %v94 = vrot.slane %v93, 2
    %v95 = vadd.f32 %v93, %v94
    %v96 = vrot.slane %v95, 1
    %v97 = vadd.f32 %v95, %v96
    %v98 = vsel %vm42, %v87, 0.0
    %v99 = vrot.slane %v98, 4
    %v100 = vadd.f32 %v98, %v99
    %v101 = vrot.slane %v100, 2
    %v102 = vadd.f32 %v100, %v101
    %v103 = vrot.slane %v102, 1
    %v104 = vadd.f32 %v102, %v103
    %v105 = vsel %vm42, %v84, 0.0
    %v106 = vrot.slane %v105, 4
    %v107 = vadd.f32 %v105, %v106
    %v108 = vrot.slane %v107, 2
    %v109 = vadd.f32 %v107, %v108
    %v110 = vrot.slane %v109, 1
    %v111 = vadd.f32 %v109, %v110
    %v112 = vsel %vm42, %v88, 0.0
    %v113 = vrot.slane %v112, 4
    %v114 = vadd.f32 %v112, %v113
    %v115 = vrot.slane %v114, 2
    %v116 = vadd.f32 %v114, %v115
    %v117 = vrot.slane %v116, 1
    %v118 = vadd.f32 %v116, %v117
    %v119 = vlog2.pop %v97
    %v120 = vmul.f32 %v119, 0.6931472
    %v121 = vlog2.pop %v104
    %v122 = vmul.f32 %v121, 0.6931472
    %v123 = vlog2.pop %v111
    %v124 = vmul.f32 %v123, 0.6931472
    %v125 = vlog2.pop %v118
    %v126 = vmul.f32 %v125, 0.6931472
    %v127 = vlaneseq
    %v128 = vshrl.u32 %v127, 7
    %v129 = vlaneseq
    %v130 = vshrl.u32 %v129, 7
    %v131 = vsub.s32 0, %v130
    %v132 = vrot.slane %v34, %v131
    %v133 = vlaneseq
    %v134 = vshrl.u32 %v133, 7
    %v135 = vsub.s32 1, %v134
    %v136 = vrot.slane %v34, %v135
    %v137 = vlaneseq
    %v138 = vshrl.u32 %v137, 7
    %v139 = vsub.s32 0, %v138
    %v140 = vrot.slane %v35, %v139
    %v141 = vlaneseq
    %v142 = vshrl.u32 %v141, 7
    %v143 = vsub.s32 1, %v142
    %v144 = vrot.slane %v35, %v143
    %vm145 = vcmp.eq.s32.totalorder %v128, %v132
    %vm146 = vcmp.eq.s32.totalorder %v128, %v136
    %vm147 = vcmp.eq.s32.totalorder %v128, %v140
    %vm148 = vcmp.eq.s32.totalorder %v128, %v144
    %v151 = vcombine.high %v79, %v79
    %v152 = vcombine.high %v80, %v80
    %v155 = vsel %vm145, %v79, 0.0
    %v156 = vsel %vm146, %v151, 0.0
    %v157 = vsel %vm147, %v80, 0.0
    %v158 = vsel %vm148, %v152, 0.0
    %v159 = vsel %vm42, %v155, 0.0
    %v160 = vrot.slane %v159, 4
    %v161 = vadd.f32 %v159, %v160
    %v162 = vrot.slane %v161, 2
    %v163 = vadd.f32 %v161, %v162
    %v164 = vrot.slane %v163, 1
    %v165 = vadd.f32 %v163, %v164
    %v166 = vsel %vm42, %v156, 0.0
    %v167 = vrot.slane %v166, 4
    %v168 = vadd.f32 %v166, %v167
    %v169 = vrot.slane %v168, 2
    %v170 = vadd.f32 %v168, %v169
    %v171 = vrot.slane %v170, 1
    %v172 = vadd.f32 %v170, %v171
    %v173 = vsel %vm42, %v157, 0.0
    %v174 = vrot.slane %v173, 4
    %v175 = vadd.f32 %v173, %v174
    %v176 = vrot.slane %v175, 2
    %v177 = vadd.f32 %v175, %v176
    %v178 = vrot.slane %v177, 1
    %v179 = vadd.f32 %v177, %v178
    %v180 = vsel %vm42, %v158, 0.0
    %v181 = vrot.slane %v180, 4
    %v182 = vadd.f32 %v180, %v181
    %v183 = vrot.slane %v182, 2
    %v184 = vadd.f32 %v182, %v183
    %v185 = vrot.slane %v184, 1
    %v186 = vadd.f32 %v184, %v185
    %v187 = vsub.f32 %v165, %v120
    %v188 = vsub.f32 %v172, %v122
    %v189 = vsub.f32 %v179, %v124
    %v190 = vsub.f32 %v186, %v126
    %v191 = vld [vmem:[%s2] sm:$0xf]
    %193 = vset.pattern.permute.xlu0 0
    %194 = vperm.xlu0 %193, %v191
    %v195 = vpop.permute.xlu0 %194
    %v197 = vsel %vm145, %v195, 0.0
    %v198 = vsel %vm146, %v195, 0.0
    %v199 = vsel %vm147, %v195, 0.0
    %v200 = vsel %vm148, %v195, 0.0
    %v201 = vsel %vm42, %v197, 0.0
    %v202 = vrot.slane %v201, 4
    %v203 = vadd.f32 %v201, %v202
    %v204 = vrot.slane %v203, 2
    %v205 = vadd.f32 %v203, %v204
    %v206 = vrot.slane %v205, 1
    %v207 = vadd.f32 %v205, %v206
    %v208 = vsel %vm42, %v198, 0.0
    %v209 = vrot.slane %v208, 4
    %v210 = vadd.f32 %v208, %v209
    %v211 = vrot.slane %v210, 2
    %v212 = vadd.f32 %v210, %v211
    %v213 = vrot.slane %v212, 1
    %v214 = vadd.f32 %v212, %v213
    %v215 = vsel %vm42, %v199, 0.0
    %v216 = vrot.slane %v215, 4
    %v217 = vadd.f32 %v215, %v216
    %v218 = vrot.slane %v217, 2
    %v219 = vadd.f32 %v217, %v218
    %v220 = vrot.slane %v219, 1
    %v221 = vadd.f32 %v219, %v220
    %v222 = vsel %vm42, %v200, 0.0
    %v223 = vrot.slane %v222, 4
    %v224 = vadd.f32 %v222, %v223
    %v225 = vrot.slane %v224, 2
    %v226 = vadd.f32 %v224, %v225
    %v227 = vrot.slane %v226, 1
    %v228 = vadd.f32 %v226, %v227
    %v229 = vmul.f32 %v207, %v187
    %v230 = vmul.f32 %v214, %v188
    %v231 = vmul.f32 %v221, %v189
    %v232 = vmul.f32 %v228, %v190
    %v233 = vsub.f32 0.0, %v229
    %v234 = vsub.f32 0.0, %v230
    %v235 = vsub.f32 0.0, %v231
    %v236 = vsub.f32 0.0, %v232
    %v237 = vmul.f32 %v187, 1.442695
    %v238 = vpow.pop %v237
    %v239 = vmul.f32 %v188, 1.442695
    %v240 = vpow.pop %v239
    %v241 = vmul.f32 %v189, 1.442695
    %v242 = vpow.pop %v241
    %v243 = vmul.f32 %v190, 1.442695
    %v244 = vpow.pop %v243
    %v245 = vsub.f32 1.0, %v238
    %v246 = vsub.f32 1.0, %v240
    %v247 = vsub.f32 1.0, %v242
    %v248 = vsub.f32 1.0, %v244
    %v249 = vmul.f32 %v245, %v245
    %v250 = vmul.f32 %v246, %v246
    %v251 = vmul.f32 %v247, %v247
    %v252 = vmul.f32 %v248, %v248
    %v253 = vmul.f32 %v249, %v233
    %v254 = vmul.f32 %v250, %v234
    %v255 = vmul.f32 %v251, %v235
    %v256 = vmul.f32 %v252, %v236
    %s257 = smul.u32 0, 256
    %v258 = vlaneseq
    %v259 = vand.u32 %v258, 127
    %v260 = vadd.s32 %v259, 128
    %v261 = vstv %s257
    %v262 = vadd.s32 %v261, %v259
    %v263 = vadd.s32 %v261, %v260
    %s264 = smul.u32 0, 2
    %v265 = vstv %s264
    %v266 = vadd.s32 %v265, 1
    %vm267 = vcmp.ne.s32.totalorder %v34, 4294967196
    %vm268 = vcmp.ne.s32.totalorder %v35, 4294967196
    %vm269 = vcmp.lt.s32.totalorder %v262, 256
    %vm270 = vcmp.lt.s32.totalorder %v263, 256
    %v271 = vsel %vm269, 1, 0
    %v272 = vsel %vm270, 1, 0
    %v273 = vcombine.low %v271, %v272
    %v275 = vunpack.c.l.s4 1966171168
    %v276 = vunpack.c.0.s8 %v275
    %v277 = vlaneseq
    %v278 = vshrl.u32 %v277, 7
    %v279 = vsub.s32 %v276, %v278
    %v280 = vrot.slane %v273, %v279
    %v282 = vunpack.c.l.s4 1966171168
    %v283 = vunpack.c.0.s8 %v282
    %v284 = vlaneseq
    %v285 = vshrl.u32 %v284, 7
    %v286 = vsub.s32 %v283, %v285
    %v287 = vrot.slane %v280, %v286
    %vm288 = vcmp.ne.s32.totalorder %v287, 0
    %vm289 = vmand %vm267, %vm288
    %vm290 = vmand %vm268, %vm288
    %vm291 = vcmp.lt.s32.totalorder %v265, 2
    %vm292 = vcmp.lt.s32.totalorder %v266, 2
    %vm293 = vmand %vm289, %vm291
    %vm294 = vmand %vm290, %vm292
    %v299 = vcombine.low %v253, %v254
    %v301 = vunpack.c.l.s4 1966171168
    %v302 = vunpack.c.0.s8 %v301
    %v303 = vlaneseq
    %v304 = vshrl.u32 %v303, 7
    %v305 = vsub.s32 %v302, %v304
    %v306 = vrot.slane %v299, %v305
    %v308 = vunpack.c.l.s4 1966171168
    %v309 = vunpack.c.0.s8 %v308
    %v310 = vlaneseq
    %v311 = vshrl.u32 %v310, 7
    %v312 = vsub.s32 %v309, %v311
    %v313 = vrot.slane %v306, %v312
    %v314 = vcombine.low %v255, %v256
    %v316 = vunpack.c.l.s4 1966171168
    %v317 = vunpack.c.0.s8 %v316
    %v318 = vlaneseq
    %v319 = vshrl.u32 %v318, 7
    %v320 = vsub.s32 %v317, %v319
    %v321 = vrot.slane %v314, %v320
    %v323 = vunpack.c.l.s4 1966171168
    %v324 = vunpack.c.0.s8 %v323
    %v325 = vlaneseq
    %v326 = vshrl.u32 %v325, 7
    %v327 = vsub.s32 %v324, %v326
    %v328 = vrot.slane %v321, %v327
    %v331 = vsel %vm293, %v313, 0.0
    %v332 = vsel %vm294, %v328, 0.0
    %v335 = vlaneseq
    %v336 = vshrl.u32 %v335, 7
    %v337 = vsub.s32 0, %v336
    %v338 = vrot.slane %v331, %v337
    %v339 = vlaneseq
    %v340 = vshrl.u32 %v339, 7
    %v341 = vsub.s32 1, %v340
    %v342 = vrot.slane %v331, %v341
    %v343 = vlaneseq
    %v344 = vshrl.u32 %v343, 7
    %v345 = vsub.s32 0, %v344
    %v346 = vrot.slane %v332, %v345
    %v347 = vlaneseq
    %v348 = vshrl.u32 %v347, 7
    %v349 = vsub.s32 1, %v348
    %v350 = vrot.slane %v332, %v349
    %vm355 = vcmask 1040384
    %v356 = vsel %vm355, %v338, 0.0
    %v357 = vsel %vm355, %v342, 0.0
    %v358 = vadd.f32 %v356, %v357
    %v359 = vsel %vm355, %v346, 0.0
    %v360 = vadd.f32 %v358, %v359
    %v361 = vsel %vm355, %v350, 0.0
    %v362 = vadd.f32 %v360, %v361
    %363 = vadd.xlane.f32.xlu0 %v362
    %v364 = vpop.xlane.xlu0 %363
    %v365 = vrot.slane %v364, 4
    %v366 = vadd.f32 %v364, %v365
    %v367 = vrot.slane %v366, 2
    %v368 = vadd.f32 %v366, %v367
    %v369 = vrot.slane %v368, 1
    %v370 = vadd.f32 %v368, %v369
    %s371 = vtos %v370
    %v372 = vstv %s371
    %vm373 = vcmask 0
    %374 = vst.msk [vmem:[#allocation5] sm:$0x1] %vm373, %v372
    %v375 = vsel %vm293, 1, 0
    %v376 = vsel %vm294, 1, 0
    %v377 = vcvt.s32.f32 %v375
    %v378 = vcvt.s32.f32 %v376
    %v381 = vlaneseq
    %v382 = vshrl.u32 %v381, 7
    %v383 = vsub.s32 0, %v382
    %v384 = vrot.slane %v377, %v383
    %v385 = vlaneseq
    %v386 = vshrl.u32 %v385, 7
    %v387 = vsub.s32 1, %v386
    %v388 = vrot.slane %v377, %v387
    %v389 = vlaneseq
    %v390 = vshrl.u32 %v389, 7
    %v391 = vsub.s32 0, %v390
    %v392 = vrot.slane %v378, %v391
    %v393 = vlaneseq
    %v394 = vshrl.u32 %v393, 7
    %v395 = vsub.s32 1, %v394
    %v396 = vrot.slane %v378, %v395
    %v401 = vsel %vm355, %v384, 0.0
    %v402 = vsel %vm355, %v388, 0.0
    %v403 = vadd.f32 %v401, %v402
    %v404 = vsel %vm355, %v392, 0.0
    %v405 = vadd.f32 %v403, %v404
    %v406 = vsel %vm355, %v396, 0.0
    %v407 = vadd.f32 %v405, %v406
    %408 = vadd.xlane.f32.xlu0 %v407
    %v409 = vpop.xlane.xlu0 %408
    %v410 = vrot.slane %v409, 4
    %v411 = vadd.f32 %v409, %v410
    %v412 = vrot.slane %v411, 2
    %v413 = vadd.f32 %v411, %v412
    %v414 = vrot.slane %v413, 1
    %v415 = vadd.f32 %v413, %v414
    %s416 = vtos %v415
    %v417 = vstv %s416
    %418 = vst.msk [vmem:[#allocation6] sm:$0x1] %vm373, %v417
    // Predicated region
    $region18: #{tpu_custom_call.1} parent=1 // pred_check
      _
    $region19: #{tpu_custom_call.1} parent=1 // pred_check_branch
      %420 = sbr.rel (0) target = $region21
    $region20: #{tpu_custom_call.1} parent=1 // pred_region
      %s422 = ssub.s32 16, 16
      %423 = vsyncadd [#allocation4], %s422
      %s425 = sshll.u32 [#allocation5], 4
      %s426 = int_to_ptr.vmem [resolvable:$true] %s425
      %428 = dma.vmem_to_hbm [thread:$0]  %s426, 16, %s3, [#allocation4]
    $region21: #{tpu_custom_call.1} parent=1 // pred_fallthru
      _
    // Predicated region
    $region22: #{tpu_custom_call.1} parent=1 // pred_check
      _
    $region23: #{tpu_custom_call.1} parent=1 // pred_check_branch
      %430 = sbr.rel (0) target = $region25
    $region24: #{tpu_custom_call.1} parent=1 // pred_region
      %s432 = ssub.s32 16, 16
      %433 = vsyncadd [#allocation7], %s432
      %s435 = sshll.u32 [#allocation6], 4
      %s436 = int_to_ptr.vmem [resolvable:$true] %s435
      %438 = dma.vmem_to_hbm [thread:$0]  %s436, 16, %s4, [#allocation7]
    $region25: #{tpu_custom_call.1} parent=1 // pred_fallthru
      _
    // Predicated region
    $region26: #{tpu_custom_call.1} parent=1 // pred_check
      _
    $region27: #{tpu_custom_call.1} parent=1 // pred_check_branch
      %440 = sbr.rel (0) target = $region29
    $region28: #{tpu_custom_call.1} parent=1 // pred_region
      %441 = dma.done [#allocation4], 16
    $region29: #{tpu_custom_call.1} parent=1 // pred_fallthru
      _
    // Predicated region
    $region30: #{tpu_custom_call.1} parent=1 // pred_check
      _
    $region31: #{tpu_custom_call.1} parent=1 // pred_check_branch
      %443 = sbr.rel (0) target = $region33
    $region32: #{tpu_custom_call.1} parent=1 // pred_region
      %444 = dma.done [#allocation7], 16
    $region33: #{tpu_custom_call.1} parent=1 // pred_fallthru
      _
    %445 = vsyncpa [#allocation3], 1
    %446 = vsyncpa [#allocation4], 1
    %447 = vsyncpa [#allocation7], 1

</llo_original>
